<compile_context>
chip_gen: v5e
topology: v5e:2x2
jax: 0.10.0
libtpu: 0.0.40
codegen_flags: <defaults>
</compile_context>

<pallas_src>
import functools

import jax
import jax.numpy as jnp
from jax.experimental import pallas as pl
from jax.experimental.pallas import tpu as pltpu


def _round_up(x, m):
    return (x + m - 1) // m * m


def _encoder_kernel(x_ref, w1_ref, b1_ref, w2_ref, b2_ref, w3_ref, b3_ref,
                    o_ref):
    # Fused 3-layer MLP on the MXU with f32 accumulation.  The input tile is
    # cast to the weight (compute) dtype in-kernel; bias-add / ReLU run in
    # f32 and activations are cast back before feeding the next dot.
    x = x_ref[...].astype(w1_ref.dtype)
    h = jnp.dot(x, w1_ref[...], preferred_element_type=jnp.float32) + b1_ref[...]
    h = jnp.maximum(h, 0.0).astype(w2_ref.dtype)
    h = jnp.dot(h, w2_ref[...], preferred_element_type=jnp.float32) + b2_ref[...]
    h = jnp.maximum(h, 0.0).astype(w3_ref.dtype)
    out = jnp.dot(h, w3_ref[...], preferred_element_type=jnp.float32) + b3_ref[...]
    o_ref[...] = out.astype(o_ref.dtype)


def prepare_params(params, compute_dtype=jnp.bfloat16):
    """One-time cast/pad of the Linear parameters (outside the per-call path).

    Weights are stored (in, out) so the kernel computes x @ W + b, matching
    torch's x @ W.T + b.  W3/b3 are zero-padded on the output dim to a
    multiple of 128 so output stores are lane-dense."""
    w1, b1, w2, b2, w3, b3 = params
    nk = w3.shape[1]
    nk_pad = _round_up(nk, 128)
    w1p = w1.astype(compute_dtype)                                  # (D, 512)
    w2p = w2.astype(compute_dtype)                                  # (512, 256)
    w3p = jnp.pad(w3.astype(compute_dtype), ((0, 0), (0, nk_pad - nk)))
    b1p = b1.astype(jnp.float32).reshape(1, -1)
    b2p = b2.astype(jnp.float32).reshape(1, -1)
    b3p = jnp.pad(b3.astype(jnp.float32).reshape(1, nk),
                  ((0, 0), (0, nk_pad - nk)))
    return (w1p, b1p, w2p, b2p, w3p, b3p)


def _choose_tile_m(M, tile_m):
    """Round tile_m to an MXU-friendly granule; guarantee >= 2 grid steps for
    large M so v7x's second TensorCore gets work."""
    if M <= 256:
        return _round_up(max(M, 8), 16)        # small problem: one small tile
    tm = _round_up(min(tile_m, _round_up(M, 256)), 256)
    if pl.cdiv(M, tm) < 2:                     # ensure both TCs get a step
        tm = _round_up(pl.cdiv(M, 2), 256)
    return tm


@functools.partial(
    jax.jit, static_argnames=("dim_h1", "categorical_dim", "tile_m"))
def encoder_forward(x, prepared_params, *, dim_h1, categorical_dim,
                    tile_m=512):
    """x: (num_sample, batch, input_dim) -> (num_sample, batch, dim_h1, K)."""
    w1p, b1p, w2p, b2p, w3p, b3p = prepared_params
    num_sample, batch, input_dim = x.shape
    H1 = w1p.shape[1]            # 512
    H2 = w2p.shape[1]            # 256
    nk_pad = w3p.shape[1]        # dim_h1*K rounded to 128
    nk = dim_h1 * categorical_dim
    out_dtype = x.dtype

    M = num_sample * batch
    x2d = x.reshape(M, input_dim)            # reshape only -- no pad/cast pass

    tm = _choose_tile_m(M, tile_m)
    grid = (pl.cdiv(M, tm),)                 # ragged last block masked by Pallas

    out2d = pl.pallas_call(
        _encoder_kernel,
        out_shape=jax.ShapeDtypeStruct((M, nk_pad), out_dtype),
        grid_spec=pltpu.PrefetchScalarGridSpec(
            num_scalar_prefetch=0,
            grid=grid,
            in_specs=[
                # x rows: full-K block (full-array-dim exception) -> no
                # garbage lanes ever reach the MXU.
                pl.BlockSpec((tm, input_dim), lambda i: (i, 0)),
                pl.BlockSpec((input_dim, H1), lambda i: (0, 0)),  # W1 resident
                pl.BlockSpec((1, H1), lambda i: (0, 0)),          # b1
                pl.BlockSpec((H1, H2), lambda i: (0, 0)),         # W2 resident
                pl.BlockSpec((1, H2), lambda i: (0, 0)),          # b2
                pl.BlockSpec((H2, nk_pad), lambda i: (0, 0)),     # W3 resident
                pl.BlockSpec((1, nk_pad), lambda i: (0, 0)),      # b3
            ],
            out_specs=pl.BlockSpec((tm, nk_pad), lambda i: (i, 0)),
        ),
        compiler_params=pltpu.CompilerParams(
            dimension_semantics=("parallel",)),
    )(x2d, w1p, b1p, w2p, b2p, w3p, b3p)

    # Strip lane padding and apply the PyTorch .view(...).  (No row slice
    # needed: the cdiv grid writes exactly M rows.)
    return out2d[:, :nk].reshape(num_sample, batch, dim_h1, categorical_dim)


def init_params(key, input_dim, dim_h1, categorical_dim, dtype=jnp.float32):
    """Deterministic synthetic parameters (shapes match the nn.Linear layers,
    stored (in, out) so the kernel computes x @ W + b == torch x @ W.T + b)."""
    nk = dim_h1 * categorical_dim
    k1, k2, k3 = jax.random.split(key, 3)
    w1 = jax.random.normal(k1, (input_dim, 512), dtype) * 0.05
    b1 = jnp.full((1, 512), 0.01, dtype)
    w2 = jax.random.normal(k2, (512, 256), dtype) * 0.05
    b2 = jnp.full((1, 256), -0.01, dtype)
    w3 = jax.random.normal(k3, (256, nk), dtype) * 0.05
    b3 = jnp.zeros((1, nk), dtype)
    return (w1, b1, w2, b2, w3, b3)


def _reference(x, params, dim_h1, categorical_dim):
    """Pure-JAX f32 reference matching the PyTorch forward."""
    w1, b1, w2, b2, w3, b3 = params
    S, B, D = x.shape
    h = jnp.maximum(x.reshape(S * B, D) @ w1 + b1, 0.0)
    h = jnp.maximum(h @ w2 + b2, 0.0)
    out = h @ w3 + b3
    return out.reshape(S, B, dim_h1, categorical_dim)


if __name__ == "__main__":
    # Small, module-consistent shapes that exercise every boundary path:
    #   M = 3*13 = 39   -> single ragged row block (tile 48, masked tail)
    #   input_dim = 200 -> non-128-multiple K (full-dim blocks, no padding)
    #   nk = 10*4 = 40  -> output lane-padded to 128 for dense stores
    num_sample = 3        # importance samples
    batch = 13
    input_dim = 200       # stands in for 784
    dim_h1 = 10           # latent dims (N)
    categorical_dim = 4   # categories per latent (K)

    key = jax.random.PRNGKey(0)
    kx, kp = jax.random.split(key)
    x = jax.random.normal(kx, (num_sample, batch, input_dim), jnp.float32)
    params = init_params(kp, input_dim, dim_h1, categorical_dim)

    # One-time weight prep (cast + pad), hoisted out of the per-call path.
    prepared = prepare_params(params)

    out = encoder_forward(x, prepared, dim_h1=dim_h1,
                          categorical_dim=categorical_dim, tile_m=512)
    out = jax.block_until_ready(out)

    assert out.shape == (num_sample, batch, dim_h1, categorical_dim), out.shape

    ref = _reference(x, params, dim_h1, categorical_dim)
    max_err = float(jnp.max(jnp.abs(out - ref)))
    # bf16 matmul inputs (f32 accumulation) -> loosened tolerance vs f32 ref.
    assert jnp.allclose(out, ref, atol=5e-2, rtol=5e-2), max_err

    print("KERNEL_OK")
</pallas_src>

<mosaic_0001>
module attributes {stable_mosaic.version = 11 : i64} {
  func.func @_encoder_kernel(%arg0: i32, %arg1: memref<48x200xf32, #tpu.memory_space<vmem>>, %arg2: memref<200x512xbf16, #tpu.memory_space<vmem>>, %arg3: memref<1x512xf32, #tpu.memory_space<vmem>>, %arg4: memref<512x256xbf16, #tpu.memory_space<vmem>>, %arg5: memref<1x256xf32, #tpu.memory_space<vmem>>, %arg6: memref<256x128xbf16, #tpu.memory_space<vmem>>, %arg7: memref<1x128xf32, #tpu.memory_space<vmem>>, %arg8: memref<48x128xf32, #tpu.memory_space<vmem>>) attributes {dimension_semantics = [#tpu.dimension_semantics<parallel>], iteration_bounds = array<i64: 1>, scalar_prefetch = 0 : i64, scratch_operands = 0 : i64, tpu.core_type = #tpu.core_type<tc>, window_params = [{transform_indices = @transform_0, window_bounds = array<i64: 48, 200>}, {pipeline_mode = #tpu.pipeline_mode<synchronous>, transform_indices = @transform_1, window_bounds = array<i64: 200, 512>}, {pipeline_mode = #tpu.pipeline_mode<synchronous>, transform_indices = @transform_2, window_bounds = array<i64: 1, 512>}, {pipeline_mode = #tpu.pipeline_mode<synchronous>, transform_indices = @transform_3, window_bounds = array<i64: 512, 256>}, {pipeline_mode = #tpu.pipeline_mode<synchronous>, transform_indices = @transform_4, window_bounds = array<i64: 1, 256>}, {pipeline_mode = #tpu.pipeline_mode<synchronous>, transform_indices = @transform_5, window_bounds = array<i64: 256, 128>}, {pipeline_mode = #tpu.pipeline_mode<synchronous>, transform_indices = @transform_6, window_bounds = array<i64: 1, 128>}, {transform_indices = @transform_7, window_bounds = array<i64: 48, 128>}]} {
    %c0 = arith.constant 0 : index
    %c0_0 = arith.constant 0 : index
    %0 = vector.load %arg1[%c0, %c0_0] : memref<48x200xf32, #tpu.memory_space<vmem>>, vector<48x200xf32>
    %1 = arith.truncf %0 : vector<48x200xf32> to vector<48x200xbf16>
    %c0_1 = arith.constant 0 : index
    %c0_2 = arith.constant 0 : index
    %2 = vector.load %arg2[%c0_1, %c0_2] : memref<200x512xbf16, #tpu.memory_space<vmem>>, vector<200x512xbf16>
    %cst = arith.constant dense<0.000000e+00> : vector<48x512xf32>
    %3 = tpu.matmul %1, %2, %cst {dimension_numbers = #tpu.dot_dimension_numbers<[1], [0], [0], [1], [0, 0, 1, 1], [], []>} : vector<48x200xbf16>, vector<200x512xbf16>, vector<48x512xf32> -> vector<48x512xf32>
    %c0_3 = arith.constant 0 : index
    %c0_4 = arith.constant 0 : index
    %4 = vector.load %arg3[%c0_3, %c0_4] : memref<1x512xf32, #tpu.memory_space<vmem>>, vector<1x512xf32>
    %5 = vector.broadcast %4 : vector<1x512xf32> to vector<48x512xf32>
    %6 = arith.addf %3, %5 : vector<48x512xf32>
    %cst_5 = arith.constant 0.000000e+00 : f32
    %7 = vector.broadcast %cst_5 : f32 to vector<48x512xf32>
    %8 = arith.maximumf %6, %7 : vector<48x512xf32>
    %9 = arith.truncf %8 : vector<48x512xf32> to vector<48x512xbf16>
    %c0_6 = arith.constant 0 : index
    %c0_7 = arith.constant 0 : index
    %10 = vector.load %arg4[%c0_6, %c0_7] : memref<512x256xbf16, #tpu.memory_space<vmem>>, vector<512x256xbf16>
    %cst_8 = arith.constant dense<0.000000e+00> : vector<48x256xf32>
    %11 = tpu.matmul %9, %10, %cst_8 {dimension_numbers = #tpu.dot_dimension_numbers<[1], [0], [0], [1], [0, 0, 1, 1], [], []>} : vector<48x512xbf16>, vector<512x256xbf16>, vector<48x256xf32> -> vector<48x256xf32>
    %c0_9 = arith.constant 0 : index
    %c0_10 = arith.constant 0 : index
    %12 = vector.load %arg5[%c0_9, %c0_10] : memref<1x256xf32, #tpu.memory_space<vmem>>, vector<1x256xf32>
    %13 = vector.broadcast %12 : vector<1x256xf32> to vector<48x256xf32>
    %14 = arith.addf %11, %13 : vector<48x256xf32>
    %cst_11 = arith.constant 0.000000e+00 : f32
    %15 = vector.broadcast %cst_11 : f32 to vector<48x256xf32>
    %16 = arith.maximumf %14, %15 : vector<48x256xf32>
    %17 = arith.truncf %16 : vector<48x256xf32> to vector<48x256xbf16>
    %c0_12 = arith.constant 0 : index
    %c0_13 = arith.constant 0 : index
    %18 = vector.load %arg6[%c0_12, %c0_13] : memref<256x128xbf16, #tpu.memory_space<vmem>>, vector<256x128xbf16>
    %cst_14 = arith.constant dense<0.000000e+00> : vector<48x128xf32>
    %19 = tpu.matmul %17, %18, %cst_14 {dimension_numbers = #tpu.dot_dimension_numbers<[1], [0], [0], [1], [0, 0, 1, 1], [], []>} : vector<48x256xbf16>, vector<256x128xbf16>, vector<48x128xf32> -> vector<48x128xf32>
    %c0_15 = arith.constant 0 : index
    %c0_16 = arith.constant 0 : index
    %20 = vector.load %arg7[%c0_15, %c0_16] : memref<1x128xf32, #tpu.memory_space<vmem>>, vector<1x128xf32>
    %21 = vector.broadcast %20 : vector<1x128xf32> to vector<48x128xf32>
    %22 = arith.addf %19, %21 : vector<48x128xf32>
    %c0_17 = arith.constant 0 : index
    %c0_18 = arith.constant 0 : index
    %23 = vector.load %arg8[%c0_17, %c0_18] : memref<48x128xf32, #tpu.memory_space<vmem>>, vector<48x128xf32>
    tpu.vector_store %arg8[%c0_17, %c0_18], %22 {strides = array<i32>} : memref<48x128xf32, #tpu.memory_space<vmem>>, vector<48x128xf32>,
    return
  }
  func.func @transform_0(%arg0: i32) -> (i32, i32) {
    %c0_i32 = arith.constant 0 : i32
    %c0_i32_0 = arith.constant 0 : i32
    return %arg0, %c0_i32 : i32, i32
  }
  func.func @transform_1(%arg0: i32) -> (i32, i32) {
    %c0_i32 = arith.constant 0 : i32
    %c0_i32_0 = arith.constant 0 : i32
    %c0_i32_1 = arith.constant 0 : i32
    return %c0_i32, %c0_i32_0 : i32, i32
  }
  func.func @transform_2(%arg0: i32) -> (i32, i32) {
    %c0_i32 = arith.constant 0 : i32
    %c0_i32_0 = arith.constant 0 : i32
    %c0_i32_1 = arith.constant 0 : i32
    return %c0_i32, %c0_i32_0 : i32, i32
  }
  func.func @transform_3(%arg0: i32) -> (i32, i32) {
    %c0_i32 = arith.constant 0 : i32
    %c0_i32_0 = arith.constant 0 : i32
    %c0_i32_1 = arith.constant 0 : i32
    return %c0_i32, %c0_i32_0 : i32, i32
  }
  func.func @transform_4(%arg0: i32) -> (i32, i32) {
    %c0_i32 = arith.constant 0 : i32
    %c0_i32_0 = arith.constant 0 : i32
    %c0_i32_1 = arith.constant 0 : i32
    return %c0_i32, %c0_i32_0 : i32, i32
  }
  func.func @transform_5(%arg0: i32) -> (i32, i32) {
    %c0_i32 = arith.constant 0 : i32
    %c0_i32_0 = arith.constant 0 : i32
    %c0_i32_1 = arith.constant 0 : i32
    return %c0_i32, %c0_i32_0 : i32, i32
  }
  func.func @transform_6(%arg0: i32) -> (i32, i32) {
    %c0_i32 = arith.constant 0 : i32
    %c0_i32_0 = arith.constant 0 : i32
    %c0_i32_1 = arith.constant 0 : i32
    return %c0_i32, %c0_i32_0 : i32, i32
  }
  func.func @transform_7(%arg0: i32) -> (i32, i32) {
    %c0_i32 = arith.constant 0 : i32
    %c0_i32_0 = arith.constant 0 : i32
    return %arg0, %c0_i32 : i32, i32
  }
}

</mosaic_0001>

<llo_original>
// kernel: encoder_forward.1
$region0: #{encoder_forward.1}
  #allocation0 [shape = 'u32[]', space=smem, size = 0x4, offset = 0x4, fixed_abs, tag = 'smem constant byte address 0x4 - core index']
  #allocation1 [shape = 'u32[72,128]{1,0:T(1,128)}', space=vmem, size = 0x9000, scoped, tag = 'internal scratch']
  %s0 = inlined_call_operand.vmem [shape: f32[39,200], index: 0, kind: input, shape index: {}]
  %s1 = inlined_call_operand.hbm [shape: bf16[200,512], index: 1, kind: input, shape index: {}]
  %s2 = inlined_call_operand.vmem [shape: f32[1,512], index: 2, kind: input, shape index: {}]
  %s3 = inlined_call_operand.hbm [shape: bf16[512,256], index: 3, kind: input, shape index: {}]
  %s4 = inlined_call_operand.vmem [shape: f32[1,256], index: 4, kind: input, shape index: {}]
  %s5 = inlined_call_operand.vmem [shape: bf16[256,128], index: 5, kind: input, shape index: {}]
  %s6 = inlined_call_operand.vmem [shape: f32[1,128], index: 6, kind: input, shape index: {}]
  %s7 = inlined_call_operand.vmem [shape: f32[39,128], index: 7, kind: output, shape index: {}]
  %s8 = sld [smem:[#allocation0]]
  $region80: #{encoder_forward.1} parent=0
    _
  %s10 = ssub.s32 1, %s8
  %s11 = scalar_select 0, %s10, %s8
  $region1: #{encoder_forward.1} parent=0
    #allocation2 [shape = 'u8[204800]{0}', space=vmem, size = 0x32000, scoped, tag = 'input window, operand 1, single buffered']
    #allocation3 [shape = 's32[1]{0}', space=sflag, size = 0x4, scoped, tag = 'scoped memory for encoder_forward.1']
    #allocation4 [shape = 'u8[262144]{0}', space=vmem, size = 0x40000, scoped, tag = 'input window, operand 3, single buffered']
    #allocation5 [shape = 's32[1]{0}', space=sflag, size = 0x4, scoped, tag = 'scoped memory for encoder_forward.1']
    #allocation6 [shape = 'u8[24576]{0}', space=vmem, size = 0x6000, scoped, tag = 'output window, operand 0, single buffered']
    %12 = vsyncpa [#allocation3], 0
    %13 = vsyncpa [#allocation5], 0
    // Predicated region
    $region2: #{encoder_forward.1} parent=1 // pred_check
      _
    $region3: #{encoder_forward.1} parent=1 // pred_check_branch
      %15 = sbr.rel (0) target = $region5
    $region4: #{encoder_forward.1} parent=1 // pred_region
      _
    $region5: #{encoder_forward.1} parent=1 // pred_fallthru
      _
    // Predicated region
    $region6: #{encoder_forward.1} parent=1 // pred_check
      _
    $region7: #{encoder_forward.1} parent=1 // pred_check_branch
      %17 = sbr.rel (0) target = $region9
    $region8: #{encoder_forward.1} parent=1 // pred_region
      %19 = vsyncadd [#allocation3], 0
      %s20 = sshll.u32 %s1, 4
      %s21 = int_to_ptr.hbm [resolvable:$true] %s20
      %s22 = sshll.u32 [#allocation2], 4
      %s23 = int_to_ptr.vmem [resolvable:$true] %s22
      %28 = dma.hbm_to_vmem [thread:$0]  %s21, 6400, %s23, [#allocation3], 256, 256, 16
    $region9: #{encoder_forward.1} parent=1 // pred_fallthru
      _
    // Predicated region
    $region10: #{encoder_forward.1} parent=1 // pred_check
      _
    $region11: #{encoder_forward.1} parent=1 // pred_check_branch
      %30 = sbr.rel (0) target = $region13
    $region12: #{encoder_forward.1} parent=1 // pred_region
      _
    $region13: #{encoder_forward.1} parent=1 // pred_fallthru
      _
    // Predicated region
    $region14: #{encoder_forward.1} parent=1 // pred_check
      _
    $region15: #{encoder_forward.1} parent=1 // pred_check_branch
      %32 = sbr.rel (0) target = $region17
    $region16: #{encoder_forward.1} parent=1 // pred_region
      %34 = vsyncadd [#allocation5], 0
      %s35 = sshll.u32 %s3, 4
      %s36 = int_to_ptr.hbm [resolvable:$true] %s35
      %s37 = sshll.u32 [#allocation4], 4
      %s38 = int_to_ptr.vmem [resolvable:$true] %s37
      %43 = dma.hbm_to_vmem [thread:$0]  %s36, 8192, %s38, [#allocation5], 128, 128, 8
    $region17: #{encoder_forward.1} parent=1 // pred_fallthru
      _
    // Predicated region
    $region18: #{encoder_forward.1} parent=1 // pred_check
      _
    $region19: #{encoder_forward.1} parent=1 // pred_check_branch
      %45 = sbr.rel (0) target = $region21
    $region20: #{encoder_forward.1} parent=1 // pred_region
      _
    $region21: #{encoder_forward.1} parent=1 // pred_fallthru
      _
    // Predicated region
    $region22: #{encoder_forward.1} parent=1 // pred_check
      _
    $region23: #{encoder_forward.1} parent=1 // pred_check_branch
      %47 = sbr.rel (0) target = $region25
    $region24: #{encoder_forward.1} parent=1 // pred_region
      _
    $region25: #{encoder_forward.1} parent=1 // pred_fallthru
      _
    // Predicated region
    $region26: #{encoder_forward.1} parent=1 // pred_check
      _
    $region27: #{encoder_forward.1} parent=1 // pred_check_branch
      %49 = sbr.rel (0) target = $region29
    $region28: #{encoder_forward.1} parent=1 // pred_region
      _
    $region29: #{encoder_forward.1} parent=1 // pred_fallthru
      _
    // Predicated region
    $region30: #{encoder_forward.1} parent=1 // pred_check
      _
    $region31: #{encoder_forward.1} parent=1 // pred_check_branch
      %51 = sbr.rel (0) target = $region33
    $region32: #{encoder_forward.1} parent=1 // pred_region
      %53 = dma.done [#allocation3], 6400
    $region33: #{encoder_forward.1} parent=1 // pred_fallthru
      _
    // Predicated region
    $region34: #{encoder_forward.1} parent=1 // pred_check
      _
    $region35: #{encoder_forward.1} parent=1 // pred_check_branch
      %55 = sbr.rel (0) target = $region37
    $region36: #{encoder_forward.1} parent=1 // pred_region
      %57 = dma.done [#allocation5], 8192
    $region37: #{encoder_forward.1} parent=1 // pred_fallthru
      _
    %v59 = vld [vmem:[%s0] sm:$0xff]
    %v60 = vld [vmem:[%s0 + $0x8] sm:$0xff]
    %v61 = vld [vmem:[%s0 + $0x10] sm:$0xff]
    %v62 = vld [vmem:[%s0 + $0x18] sm:$0xff]
    %v63 = vld [vmem:[%s0 + $0x20] sm:$0xff]
    %v64 = vld [vmem:[%s0 + $0x28] sm:$0xff]
    %v65 = vld [vmem:[%s0 + $0x30] sm:$0xff]
    %v66 = vld [vmem:[%s0 + $0x38] sm:$0xff]
    %v67 = vld [vmem:[%s0 + $0x40] sm:$0xff]
    %v68 = vld [vmem:[%s0 + $0x48] sm:$0xff]
    %v69 = vld [vmem:[%s0 + $0x50] sm:$0xff]
    %v70 = vld [vmem:[%s0 + $0x58] sm:$0xff]
    %v71 = vpack.c.bf16 %v61, %v59
    %v72 = vpack.c.bf16 %v62, %v60
    %v73 = vpack.c.bf16 %v65, %v63
    %v74 = vpack.c.bf16 %v66, %v64
    %v75 = vpack.c.bf16 %v69, %v67
    %v76 = vpack.c.bf16 %v70, %v68
    %v77 = vld [vmem:[#allocation2] sm:$0xff]
    %v78 = vld [vmem:[#allocation2 + $0x8] sm:$0xff]
    %v79 = vld [vmem:[#allocation2 + $0x10] sm:$0xff]
    %v80 = vld [vmem:[#allocation2 + $0x18] sm:$0xff]
    %v81 = vld [vmem:[#allocation2 + $0x20] sm:$0xff]
    %v82 = vld [vmem:[#allocation2 + $0x28] sm:$0xff]
    %v83 = vld [vmem:[#allocation2 + $0x30] sm:$0xff]
    %v84 = vld [vmem:[#allocation2 + $0x38] sm:$0xff]
    %v85 = vld [vmem:[#allocation2 + $0x40] sm:$0xff]
    %v86 = vld [vmem:[#allocation2 + $0x48] sm:$0xff]
    %v87 = vld [vmem:[#allocation2 + $0x50] sm:$0xff]
    %v88 = vld [vmem:[#allocation2 + $0x58] sm:$0xff]
    %v89 = vld [vmem:[#allocation2 + $0x60] sm:$0xff]
    %v90 = vld [vmem:[#allocation2 + $0x68] sm:$0xff]
    %v91 = vld [vmem:[#allocation2 + $0x70] sm:$0xff]
    %v92 = vld [vmem:[#allocation2 + $0x78] sm:$0xff]
    %v93 = vld [vmem:[#allocation2 + $0x80] sm:$0xff]
    %v94 = vld [vmem:[#allocation2 + $0x88] sm:$0xff]
    %v95 = vld [vmem:[#allocation2 + $0x90] sm:$0xff]
    %v96 = vld [vmem:[#allocation2 + $0x98] sm:$0xff]
    %v97 = vld [vmem:[#allocation2 + $0xa0] sm:$0xff]
    %v98 = vld [vmem:[#allocation2 + $0xa8] sm:$0xff]
    %v99 = vld [vmem:[#allocation2 + $0xb0] sm:$0xff]
    %v100 = vld [vmem:[#allocation2 + $0xb8] sm:$0xff]
    %v101 = vld [vmem:[#allocation2 + $0xc0] sm:$0xff]
    %v102 = vld [vmem:[#allocation2 + $0xc8] sm:$0xff]
    %v103 = vld [vmem:[#allocation2 + $0xd0] sm:$0xff]
    %v104 = vld [vmem:[#allocation2 + $0xd8] sm:$0xff]
    %v105 = vld [vmem:[#allocation2 + $0xe0] sm:$0xff]
    %v106 = vld [vmem:[#allocation2 + $0xe8] sm:$0xff]
    %v107 = vld [vmem:[#allocation2 + $0xf0] sm:$0xff]
    %v108 = vld [vmem:[#allocation2 + $0xf8] sm:$0xff]
    %v109 = vld [vmem:[#allocation2 + $0x100] sm:$0xff]
    %v110 = vld [vmem:[#allocation2 + $0x108] sm:$0xff]
    %v111 = vld [vmem:[#allocation2 + $0x110] sm:$0xff]
    %v112 = vld [vmem:[#allocation2 + $0x118] sm:$0xff]
    %v113 = vld [vmem:[#allocation2 + $0x120] sm:$0xff]
    %v114 = vld [vmem:[#allocation2 + $0x128] sm:$0xff]
    %v115 = vld [vmem:[#allocation2 + $0x130] sm:$0xff]
    %v116 = vld [vmem:[#allocation2 + $0x138] sm:$0xff]
    %v117 = vld [vmem:[#allocation2 + $0x140] sm:$0xff]
    %v118 = vld [vmem:[#allocation2 + $0x148] sm:$0xff]
    %v119 = vld [vmem:[#allocation2 + $0x150] sm:$0xff]
    %v120 = vld [vmem:[#allocation2 + $0x158] sm:$0xff]
    %v121 = vld [vmem:[#allocation2 + $0x160] sm:$0xff]
    %v122 = vld [vmem:[#allocation2 + $0x168] sm:$0xff]
    %v123 = vld [vmem:[#allocation2 + $0x170] sm:$0xff]
    %v124 = vld [vmem:[#allocation2 + $0x178] sm:$0xff]
    %v125 = vld [vmem:[#allocation2 + $0x180] sm:$0xff]
    %v126 = vld [vmem:[#allocation2 + $0x188] sm:$0xff]
    %v127 = vld [vmem:[%s2] sm:$0xf]
    %v129 = vperm.slane %v127, 0
    %v130 = vperm.slane %v127, 1
    %v131 = vperm.slane %v127, 2
    %v132 = vperm.slane %v127, 3
    %v187 = vunpack.c.l.b16 %v77
    %v188 = vunpack.c.h.b16 %v77
    %v189 = vunpack.c.l.b16 %v78
    %v190 = vunpack.c.h.b16 %v78
    %v191 = vunpack.c.l.b16 %v79
    %v192 = vunpack.c.h.b16 %v79
    %v193 = vunpack.c.l.b16 %v80
    %v194 = vunpack.c.h.b16 %v80
    %v195 = vunpack.c.l.b16 %v81
    %v196 = vunpack.c.h.b16 %v81
    %v197 = vunpack.c.l.b16 %v82
    %v198 = vunpack.c.h.b16 %v82
    %v199 = vunpack.c.l.b16 %v83
    %v200 = vunpack.c.h.b16 %v83
    %v201 = vunpack.c.l.b16 %v84
    %v202 = vunpack.c.h.b16 %v84
    %v203 = vunpack.c.l.b16 %v85
    %v204 = vunpack.c.h.b16 %v85
    %v205 = vunpack.c.l.b16 %v86
    %v206 = vunpack.c.h.b16 %v86
    %v207 = vunpack.c.l.b16 %v87
    %v208 = vunpack.c.h.b16 %v87
    %v209 = vunpack.c.l.b16 %v88
    %v210 = vunpack.c.h.b16 %v88
    %v211 = vunpack.c.l.b16 %v89
    %v212 = vunpack.c.h.b16 %v89
    %v213 = vunpack.c.l.b16 %v90
    %v214 = vunpack.c.h.b16 %v90
    %v215 = vunpack.c.l.b16 %v91
    %v216 = vunpack.c.h.b16 %v91
    %v217 = vunpack.c.l.b16 %v92
    %v218 = vunpack.c.h.b16 %v92
    %v219 = vunpack.c.l.b16 %v93
    %v220 = vunpack.c.h.b16 %v93
    %v221 = vunpack.c.l.b16 %v94
    %v222 = vunpack.c.h.b16 %v94
    %v223 = vunpack.c.l.b16 %v95
    %v224 = vunpack.c.h.b16 %v95
    %v225 = vunpack.c.l.b16 %v96
    %v226 = vunpack.c.h.b16 %v96
    %v227 = vunpack.c.l.b16 %v97
    %v228 = vunpack.c.h.b16 %v97
    %v229 = vunpack.c.l.b16 %v98
    %v230 = vunpack.c.h.b16 %v98
    %v231 = vunpack.c.l.b16 %v99
    %v232 = vunpack.c.h.b16 %v99
    %v233 = vunpack.c.l.b16 %v100
    %v234 = vunpack.c.h.b16 %v100
    %v235 = vunpack.c.l.b16 %v101
    %v236 = vunpack.c.h.b16 %v101
    %v237 = vunpack.c.l.b16 %v102
    %v238 = vunpack.c.h.b16 %v102
    %v239 = vunpack.c.l.b16 %v103
    %v240 = vunpack.c.h.b16 %v103
    %v241 = vunpack.c.l.b16 %v104
    %v242 = vunpack.c.h.b16 %v104
    %v243 = vunpack.c.l.b16 %v105
    %v244 = vunpack.c.h.b16 %v105
    %v245 = vunpack.c.l.b16 %v106
    %v246 = vunpack.c.h.b16 %v106
    %v247 = vunpack.c.l.b16 %v107
    %v248 = vunpack.c.h.b16 %v107
    %v249 = vunpack.c.l.b16 %v108
    %v250 = vunpack.c.h.b16 %v108
    %v251 = vunpack.c.l.b16 %v109
    %v252 = vunpack.c.h.b16 %v109
    %v253 = vunpack.c.l.b16 %v110
    %v254 = vunpack.c.h.b16 %v110
    %v255 = vunpack.c.l.b16 %v111
    %v256 = vunpack.c.h.b16 %v111
    %v257 = vunpack.c.l.b16 %v112
    %v258 = vunpack.c.h.b16 %v112
    %v259 = vunpack.c.l.b16 %v113
    %v260 = vunpack.c.h.b16 %v113
    %v261 = vunpack.c.l.b16 %v114
    %v262 = vunpack.c.h.b16 %v114
    %v263 = vunpack.c.l.b16 %v115
    %v264 = vunpack.c.h.b16 %v115
    %v265 = vunpack.c.l.b16 %v116
    %v266 = vunpack.c.h.b16 %v116
    %v267 = vunpack.c.l.b16 %v117
    %v268 = vunpack.c.h.b16 %v117
    %v269 = vunpack.c.l.b16 %v118
    %v270 = vunpack.c.h.b16 %v118
    %v271 = vunpack.c.l.b16 %v119
    %v272 = vunpack.c.h.b16 %v119
    %v273 = vunpack.c.l.b16 %v120
    %v274 = vunpack.c.h.b16 %v120
    %v275 = vunpack.c.l.b16 %v121
    %v276 = vunpack.c.h.b16 %v121
    %v277 = vunpack.c.l.b16 %v122
    %v278 = vunpack.c.h.b16 %v122
    %v279 = vunpack.c.l.b16 %v123
    %v280 = vunpack.c.h.b16 %v123
    %v281 = vunpack.c.l.b16 %v124
    %v282 = vunpack.c.h.b16 %v124
    %v283 = vunpack.c.l.b16 %v125
    %v284 = vunpack.c.h.b16 %v125
    %v285 = vunpack.c.l.b16 %v126
    %v286 = vunpack.c.h.b16 %v126
    %v287 = vpack.c.b16 %v191, %v187
    %v288 = vpack.c.b16 %v192, %v188
    %v289 = vpack.c.b16 %v193, %v189
    %v290 = vpack.c.b16 %v194, %v190
    %v291 = vpack.c.b16 %v199, %v195
    %v292 = vpack.c.b16 %v200, %v196
    %v293 = vpack.c.b16 %v201, %v197
    %v294 = vpack.c.b16 %v202, %v198
    %v295 = vpack.c.b16 %v207, %v203
    %v296 = vpack.c.b16 %v208, %v204
    %v297 = vpack.c.b16 %v209, %v205
    %v298 = vpack.c.b16 %v210, %v206
    %v299 = vpack.c.b16 %v215, %v211
    %v300 = vpack.c.b16 %v216, %v212
    %v301 = vpack.c.b16 %v217, %v213
    %v302 = vpack.c.b16 %v218, %v214
    %v303 = vpack.c.b16 %v223, %v219
    %v304 = vpack.c.b16 %v224, %v220
    %v305 = vpack.c.b16 %v225, %v221
    %v306 = vpack.c.b16 %v226, %v222
    %v307 = vpack.c.b16 %v231, %v227
    %v308 = vpack.c.b16 %v232, %v228
    %v309 = vpack.c.b16 %v233, %v229
    %v310 = vpack.c.b16 %v234, %v230
    %v311 = vpack.c.b16 %v239, %v235
    %v312 = vpack.c.b16 %v240, %v236
    %v313 = vpack.c.b16 %v241, %v237
    %v314 = vpack.c.b16 %v242, %v238
    %v315 = vpack.c.b16 %v247, %v243
    %v316 = vpack.c.b16 %v248, %v244
    %v317 = vpack.c.b16 %v249, %v245
    %v318 = vpack.c.b16 %v250, %v246
    %v319 = vpack.c.b16 %v255, %v251
    %v320 = vpack.c.b16 %v256, %v252
    %v321 = vpack.c.b16 %v257, %v253
    %v322 = vpack.c.b16 %v258, %v254
    %v323 = vpack.c.b16 %v263, %v259
    %v324 = vpack.c.b16 %v264, %v260
    %v325 = vpack.c.b16 %v265, %v261
    %v326 = vpack.c.b16 %v266, %v262
    %v327 = vpack.c.b16 %v271, %v267
    %v328 = vpack.c.b16 %v272, %v268
    %v329 = vpack.c.b16 %v273, %v269
    %v330 = vpack.c.b16 %v274, %v270
    %v331 = vpack.c.b16 %v279, %v275
    %v332 = vpack.c.b16 %v280, %v276
    %v333 = vpack.c.b16 %v281, %v277
    %v334 = vpack.c.b16 %v282, %v278
    %v335 = vpack.c.b16 %v283, %v283
    %v336 = vpack.c.b16 %v284, %v284
    %v337 = vpack.c.b16 %v285, %v285
    %v338 = vpack.c.b16 %v286, %v286
    %vm387 = vcmask 588800
    %v389 = vsel %vm387, %v72, 0
    %v392 = vsel %vm387, %v74, 0
    %v395 = vsel %vm387, %v76, 0
    %vm397 = vcmask 1043456
    %v399 = vsel %vm397, %v335, 0
    %v402 = vsel %vm397, %v336, 0
    %v405 = vsel %vm397, %v337, 0
    %v408 = vsel %vm397, %v338, 0
    %410 = vmatpush.bf16.msra.mxu0 %v315
    %411 = vmatpush.bf16.msra.mxu0 %v311
    %412 = vmatpush.bf16.msra.mxu0 %v307
    %413 = vmatpush.bf16.msra.mxu0 %v303
    %414 = vmatpush.bf16.msra.mxu0 %v299
    %415 = vmatpush.bf16.msra.mxu0 %v295
    %416 = vmatpush.bf16.msra.mxu0 %v291
    %417 = vmatpush.bf16.msra.mxu0 %v287
    %418 = vmatmul.bf16.gmra.mxu0 %v71
    %v419 = vpop.f32.mrf.mxu0
    %v420 = vadd.f32 %v129, %v419
    %v421 = vpop.f32.mrf.mxu0
    %v422 = vadd.f32 %v129, %v421
    %423 = vmatmul.bf16.gmra.mxu0 %v73
    %v424 = vpop.f32.mrf.mxu0
    %v425 = vadd.f32 %v129, %v424
    %v426 = vpop.f32.mrf.mxu0
    %v427 = vadd.f32 %v129, %v426
    %428 = vmatmul.bf16.gmra.mxu0 %v75
    %v429 = vpop.f32.mrf.mxu0
    %v430 = vadd.f32 %v129, %v429
    %v431 = vpop.f32.mrf.mxu0
    %v432 = vadd.f32 %v129, %v431
    %433 = vdwg.mxu0
    %434 = vmatpush.bf16.msra.mxu0 0
    %435 = vmatpush.bf16.msra.mxu0 0
    %436 = vmatpush.bf16.msra.mxu0 0
    %437 = vmatpush.bf16.msra.mxu0 %v399
    %438 = vmatpush.bf16.msra.mxu0 %v331
    %439 = vmatpush.bf16.msra.mxu0 %v327
    %440 = vmatpush.bf16.msra.mxu0 %v323
    %441 = vmatpush.bf16.msra.mxu0 %v319
    %442 = vmatmul.bf16.gmra.mxu0 %v389
    %v443 = vpop.f32.mrf.mxu0
    %v444 = vadd.f32 %v420, %v443
    %v445 = vpop.f32.mrf.mxu0
    %v446 = vadd.f32 %v422, %v445
    %447 = vmatmul.bf16.gmra.mxu0 %v392
    %v448 = vpop.f32.mrf.mxu0
    %v449 = vadd.f32 %v425, %v448
    %v450 = vpop.f32.mrf.mxu0
    %v451 = vadd.f32 %v427, %v450
    %452 = vmatmul.bf16.gmra.mxu0 %v395
    %v453 = vpop.f32.mrf.mxu0
    %v454 = vadd.f32 %v430, %v453
    %v455 = vpop.f32.mrf.mxu0
    %v456 = vadd.f32 %v432, %v455
    %457 = vdwg.mxu0
    %458 = vmatpush.bf16.msra.mxu0 %v316
    %459 = vmatpush.bf16.msra.mxu0 %v312
    %460 = vmatpush.bf16.msra.mxu0 %v308
    %461 = vmatpush.bf16.msra.mxu0 %v304
    %462 = vmatpush.bf16.msra.mxu0 %v300
    %463 = vmatpush.bf16.msra.mxu0 %v296
    %464 = vmatpush.bf16.msra.mxu0 %v292
    %465 = vmatpush.bf16.msra.mxu0 %v288
    %466 = vmatmul.bf16.gmra.mxu0 %v71
    %v467 = vpop.f32.mrf.mxu0
    %v468 = vadd.f32 %v130, %v467
    %v469 = vpop.f32.mrf.mxu0
    %v470 = vadd.f32 %v130, %v469
    %471 = vmatmul.bf16.gmra.mxu0 %v73
    %v472 = vpop.f32.mrf.mxu0
    %v473 = vadd.f32 %v130, %v472
    %v474 = vpop.f32.mrf.mxu0
    %v475 = vadd.f32 %v130, %v474
    %476 = vmatmul.bf16.gmra.mxu0 %v75
    %v477 = vpop.f32.mrf.mxu0
    %v478 = vadd.f32 %v130, %v477
    %v479 = vpop.f32.mrf.mxu0
    %v480 = vadd.f32 %v130, %v479
    %481 = vdwg.mxu0
    %482 = vmatpush.bf16.msra.mxu0 0
    %483 = vmatpush.bf16.msra.mxu0 0
    %484 = vmatpush.bf16.msra.mxu0 0
    %485 = vmatpush.bf16.msra.mxu0 %v402
    %486 = vmatpush.bf16.msra.mxu0 %v332
    %487 = vmatpush.bf16.msra.mxu0 %v328
    %488 = vmatpush.bf16.msra.mxu0 %v324
    %489 = vmatpush.bf16.msra.mxu0 %v320
    %490 = vmatmul.bf16.gmra.mxu0 %v389
    %v491 = vpop.f32.mrf.mxu0
    %v492 = vadd.f32 %v468, %v491
    %v493 = vpop.f32.mrf.mxu0
    %v494 = vadd.f32 %v470, %v493
    %495 = vmatmul.bf16.gmra.mxu0 %v392
    %v496 = vpop.f32.mrf.mxu0
    %v497 = vadd.f32 %v473, %v496
    %v498 = vpop.f32.mrf.mxu0
    %v499 = vadd.f32 %v475, %v498
    %500 = vmatmul.bf16.gmra.mxu0 %v395
    %v501 = vpop.f32.mrf.mxu0
    %v502 = vadd.f32 %v478, %v501
    %v503 = vpop.f32.mrf.mxu0
    %v504 = vadd.f32 %v480, %v503
    %505 = vdwg.mxu0
    %506 = vmatpush.bf16.msra.mxu0 %v317
    %507 = vmatpush.bf16.msra.mxu0 %v313
    %508 = vmatpush.bf16.msra.mxu0 %v309
    %509 = vmatpush.bf16.msra.mxu0 %v305
    %510 = vmatpush.bf16.msra.mxu0 %v301
    %511 = vmatpush.bf16.msra.mxu0 %v297
    %512 = vmatpush.bf16.msra.mxu0 %v293
    %513 = vmatpush.bf16.msra.mxu0 %v289
    %514 = vmatmul.bf16.gmra.mxu0 %v71
    %v515 = vpop.f32.mrf.mxu0
    %v516 = vadd.f32 %v131, %v515
    %v517 = vpop.f32.mrf.mxu0
    %v518 = vadd.f32 %v131, %v517
    %519 = vmatmul.bf16.gmra.mxu0 %v73
    %v520 = vpop.f32.mrf.mxu0
    %v521 = vadd.f32 %v131, %v520
    %v522 = vpop.f32.mrf.mxu0
    %v523 = vadd.f32 %v131, %v522
    %524 = vmatmul.bf16.gmra.mxu0 %v75
    %v525 = vpop.f32.mrf.mxu0
    %v526 = vadd.f32 %v131, %v525
    %v527 = vpop.f32.mrf.mxu0
    %v528 = vadd.f32 %v131, %v527
    %529 = vdwg.mxu0
    %530 = vmatpush.bf16.msra.mxu0 0
    %531 = vmatpush.bf16.msra.mxu0 0
    %532 = vmatpush.bf16.msra.mxu0 0
    %533 = vmatpush.bf16.msra.mxu0 %v405
    %534 = vmatpush.bf16.msra.mxu0 %v333
    %535 = vmatpush.bf16.msra.mxu0 %v329
    %536 = vmatpush.bf16.msra.mxu0 %v325
    %537 = vmatpush.bf16.msra.mxu0 %v321
    %538 = vmatmul.bf16.gmra.mxu0 %v389
    %v539 = vpop.f32.mrf.mxu0
    %v540 = vadd.f32 %v516, %v539
    %v541 = vpop.f32.mrf.mxu0
    %v542 = vadd.f32 %v518, %v541
    %543 = vmatmul.bf16.gmra.mxu0 %v392
    %v544 = vpop.f32.mrf.mxu0
    %v545 = vadd.f32 %v521, %v544
    %v546 = vpop.f32.mrf.mxu0
    %v547 = vadd.f32 %v523, %v546
    %548 = vmatmul.bf16.gmra.mxu0 %v395
    %v549 = vpop.f32.mrf.mxu0
    %v550 = vadd.f32 %v526, %v549
    %v551 = vpop.f32.mrf.mxu0
    %v552 = vadd.f32 %v528, %v551
    %553 = vdwg.mxu0
    %554 = vmatpush.bf16.msra.mxu0 %v318
    %555 = vmatpush.bf16.msra.mxu0 %v314
    %556 = vmatpush.bf16.msra.mxu0 %v310
    %557 = vmatpush.bf16.msra.mxu0 %v306
    %558 = vmatpush.bf16.msra.mxu0 %v302
    %559 = vmatpush.bf16.msra.mxu0 %v298
    %560 = vmatpush.bf16.msra.mxu0 %v294
    %561 = vmatpush.bf16.msra.mxu0 %v290
    %562 = vmatmul.bf16.gmra.mxu0 %v71
    %v563 = vpop.f32.mrf.mxu0
    %v564 = vadd.f32 %v132, %v563
    %v565 = vpop.f32.mrf.mxu0
    %v566 = vadd.f32 %v132, %v565
    %567 = vmatmul.bf16.gmra.mxu0 %v73
    %v568 = vpop.f32.mrf.mxu0
    %v569 = vadd.f32 %v132, %v568
    %v570 = vpop.f32.mrf.mxu0
    %v571 = vadd.f32 %v132, %v570
    %572 = vmatmul.bf16.gmra.mxu0 %v75
    %v573 = vpop.f32.mrf.mxu0
    %v574 = vadd.f32 %v132, %v573
    %v575 = vpop.f32.mrf.mxu0
    %v576 = vadd.f32 %v132, %v575
    %577 = vdwg.mxu0
    %578 = vmatpush.bf16.msra.mxu0 0
    %579 = vmatpush.bf16.msra.mxu0 0
    %580 = vmatpush.bf16.msra.mxu0 0
    %581 = vmatpush.bf16.msra.mxu0 %v408
    %582 = vmatpush.bf16.msra.mxu0 %v334
    %583 = vmatpush.bf16.msra.mxu0 %v330
    %584 = vmatpush.bf16.msra.mxu0 %v326
    %585 = vmatpush.bf16.msra.mxu0 %v322
    %586 = vmatmul.bf16.gmra.mxu0 %v389
    %v587 = vpop.f32.mrf.mxu0
    %v588 = vadd.f32 %v564, %v587
    %v589 = vpop.f32.mrf.mxu0
    %v590 = vadd.f32 %v566, %v589
    %591 = vmatmul.bf16.gmra.mxu0 %v392
    %v592 = vpop.f32.mrf.mxu0
    %v593 = vadd.f32 %v569, %v592
    %v594 = vpop.f32.mrf.mxu0
    %v595 = vadd.f32 %v571, %v594
    %596 = vmatmul.bf16.gmra.mxu0 %v395
    %v597 = vpop.f32.mrf.mxu0
    %v598 = vadd.f32 %v574, %v597
    %v599 = vpop.f32.mrf.mxu0
    %v600 = vadd.f32 %v576, %v599
    %601 = vdwg.mxu0
    %v602 = vmax.f32 %v444, 0.0
    %v603 = vmax.f32 %v492, 0.0
    %v604 = vmax.f32 %v540, 0.0
    %v605 = vmax.f32 %v588, 0.0
    %v606 = vmax.f32 %v446, 0.0
    %v607 = vmax.f32 %v494, 0.0
    %v608 = vmax.f32 %v542, 0.0
    %v609 = vmax.f32 %v590, 0.0
    %v610 = vmax.f32 %v449, 0.0
    %v611 = vmax.f32 %v497, 0.0
    %v612 = vmax.f32 %v545, 0.0
    %v613 = vmax.f32 %v593, 0.0
    %v614 = vmax.f32 %v451, 0.0
    %v615 = vmax.f32 %v499, 0.0
    %v616 = vmax.f32 %v547, 0.0
    %v617 = vmax.f32 %v595, 0.0
    %v618 = vmax.f32 %v454, 0.0
    %v619 = vmax.f32 %v502, 0.0
    %v620 = vmax.f32 %v550, 0.0
    %v621 = vmax.f32 %v598, 0.0
    %v622 = vmax.f32 %v456, 0.0
    %v623 = vmax.f32 %v504, 0.0
    %v624 = vmax.f32 %v552, 0.0
    %v625 = vmax.f32 %v600, 0.0
    %v626 = vpack.c.bf16 %v606, %v602
    %v627 = vpack.c.bf16 %v607, %v603
    %v628 = vpack.c.bf16 %v608, %v604
    %v629 = vpack.c.bf16 %v609, %v605
    %v630 = vpack.c.bf16 %v614, %v610
    %v631 = vpack.c.bf16 %v615, %v611
    %v632 = vpack.c.bf16 %v616, %v612
    %v633 = vpack.c.bf16 %v617, %v613
    %v634 = vpack.c.bf16 %v622, %v618
    %v635 = vpack.c.bf16 %v623, %v619
    %v636 = vpack.c.bf16 %v624, %v620
    %v637 = vpack.c.bf16 %v625, %v621
    %v638 = vld [vmem:[#allocation4] sm:$0xff]
    %v639 = vld [vmem:[#allocation4 + $0x8] sm:$0xff]
    %v640 = vld [vmem:[#allocation4 + $0x10] sm:$0xff]
    %v641 = vld [vmem:[#allocation4 + $0x18] sm:$0xff]
    %v642 = vld [vmem:[#allocation4 + $0x20] sm:$0xff]
    %v643 = vld [vmem:[#allocation4 + $0x28] sm:$0xff]
    %v644 = vld [vmem:[#allocation4 + $0x30] sm:$0xff]
    %v645 = vld [vmem:[#allocation4 + $0x38] sm:$0xff]
    %v646 = vld [vmem:[#allocation4 + $0x40] sm:$0xff]
    %v647 = vld [vmem:[#allocation4 + $0x48] sm:$0xff]
    %v648 = vld [vmem:[#allocation4 + $0x50] sm:$0xff]
    %v649 = vld [vmem:[#allocation4 + $0x58] sm:$0xff]
    %v650 = vld [vmem:[#allocation4 + $0x60] sm:$0xff]
    %v651 = vld [vmem:[#allocation4 + $0x68] sm:$0xff]
    %v652 = vld [vmem:[#allocation4 + $0x70] sm:$0xff]
    %v653 = vld [vmem:[#allocation4 + $0x78] sm:$0xff]
    %v654 = vld [vmem:[#allocation4 + $0x80] sm:$0xff]
    %v655 = vld [vmem:[#allocation4 + $0x88] sm:$0xff]
    %v656 = vld [vmem:[#allocation4 + $0x90] sm:$0xff]
    %v657 = vld [vmem:[#allocation4 + $0x98] sm:$0xff]
    %v658 = vld [vmem:[#allocation4 + $0xa0] sm:$0xff]
    %v659 = vld [vmem:[#allocation4 + $0xa8] sm:$0xff]
    %v660 = vld [vmem:[#allocation4 + $0xb0] sm:$0xff]
    %v661 = vld [vmem:[#allocation4 + $0xb8] sm:$0xff]
    %v662 = vld [vmem:[#allocation4 + $0xc0] sm:$0xff]
    %v663 = vld [vmem:[#allocation4 + $0xc8] sm:$0xff]
    %v664 = vld [vmem:[#allocation4 + $0xd0] sm:$0xff]
    %v665 = vld [vmem:[#allocation4 + $0xd8] sm:$0xff]
    %v666 = vld [vmem:[#allocation4 + $0xe0] sm:$0xff]
    %v667 = vld [vmem:[#allocation4 + $0xe8] sm:$0xff]
    %v668 = vld [vmem:[#allocation4 + $0xf0] sm:$0xff]
    %v669 = vld [vmem:[#allocation4 + $0xf8] sm:$0xff]
    %v670 = vld [vmem:[#allocation4 + $0x100] sm:$0xff]
    %v671 = vld [vmem:[#allocation4 + $0x108] sm:$0xff]
    %v672 = vld [vmem:[#allocation4 + $0x110] sm:$0xff]
    %v673 = vld [vmem:[#allocation4 + $0x118] sm:$0xff]
    %v674 = vld [vmem:[#allocation4 + $0x120] sm:$0xff]
    %v675 = vld [vmem:[#allocation4 + $0x128] sm:$0xff]
    %v676 = vld [vmem:[#allocation4 + $0x130] sm:$0xff]
    %v677 = vld [vmem:[#allocation4 + $0x138] sm:$0xff]
    %v678 = vld [vmem:[#allocation4 + $0x140] sm:$0xff]
    %v679 = vld [vmem:[#allocation4 + $0x148] sm:$0xff]
    %v680 = vld [vmem:[#allocation4 + $0x150] sm:$0xff]
    %v681 = vld [vmem:[#allocation4 + $0x158] sm:$0xff]
    %v682 = vld [vmem:[#allocation4 + $0x160] sm:$0xff]
    %v683 = vld [vmem:[#allocation4 + $0x168] sm:$0xff]
    %v684 = vld [vmem:[#allocation4 + $0x170] sm:$0xff]
    %v685 = vld [vmem:[#allocation4 + $0x178] sm:$0xff]
    %v686 = vld [vmem:[#allocation4 + $0x180] sm:$0xff]
    %v687 = vld [vmem:[#allocation4 + $0x188] sm:$0xff]
    %v688 = vld [vmem:[#allocation4 + $0x190] sm:$0xff]
    %v689 = vld [vmem:[#allocation4 + $0x198] sm:$0xff]
    %v690 = vld [vmem:[#allocation4 + $0x1a0] sm:$0xff]
    %v691 = vld [vmem:[#allocation4 + $0x1a8] sm:$0xff]
    %v692 = vld [vmem:[#allocation4 + $0x1b0] sm:$0xff]
    %v693 = vld [vmem:[#allocation4 + $0x1b8] sm:$0xff]
    %v694 = vld [vmem:[#allocation4 + $0x1c0] sm:$0xff]
    %v695 = vld [vmem:[#allocation4 + $0x1c8] sm:$0xff]
    %v696 = vld [vmem:[#allocation4 + $0x1d0] sm:$0xff]
    %v697 = vld [vmem:[#allocation4 + $0x1d8] sm:$0xff]
    %v698 = vld [vmem:[#allocation4 + $0x1e0] sm:$0xff]
    %v699 = vld [vmem:[#allocation4 + $0x1e8] sm:$0xff]
    %v700 = vld [vmem:[#allocation4 + $0x1f0] sm:$0xff]
    %v701 = vld [vmem:[#allocation4 + $0x1f8] sm:$0xff]
    %v702 = vld [vmem:[%s4] sm:$0x3]
    %v704 = vperm.slane %v702, 0
    %v705 = vperm.slane %v702, 1
    %v772 = vunpack.c.l.b16 %v638
    %v773 = vunpack.c.h.b16 %v638
    %v774 = vunpack.c.l.b16 %v639
    %v775 = vunpack.c.h.b16 %v639
    %v776 = vunpack.c.l.b16 %v640
    %v777 = vunpack.c.h.b16 %v640
    %v778 = vunpack.c.l.b16 %v641
    %v779 = vunpack.c.h.b16 %v641
    %v780 = vunpack.c.l.b16 %v642
    %v781 = vunpack.c.h.b16 %v642
    %v782 = vunpack.c.l.b16 %v643
    %v783 = vunpack.c.h.b16 %v643
    %v784 = vunpack.c.l.b16 %v644
    %v785 = vunpack.c.h.b16 %v644
    %v786 = vunpack.c.l.b16 %v645
    %v787 = vunpack.c.h.b16 %v645
    %v788 = vunpack.c.l.b16 %v646
    %v789 = vunpack.c.h.b16 %v646
    %v790 = vunpack.c.l.b16 %v647
    %v791 = vunpack.c.h.b16 %v647
    %v792 = vunpack.c.l.b16 %v648
    %v793 = vunpack.c.h.b16 %v648
    %v794 = vunpack.c.l.b16 %v649
    %v795 = vunpack.c.h.b16 %v649
    %v796 = vunpack.c.l.b16 %v650
    %v797 = vunpack.c.h.b16 %v650
    %v798 = vunpack.c.l.b16 %v651
    %v799 = vunpack.c.h.b16 %v651
    %v800 = vunpack.c.l.b16 %v652
    %v801 = vunpack.c.h.b16 %v652
    %v802 = vunpack.c.l.b16 %v653
    %v803 = vunpack.c.h.b16 %v653
    %v804 = vunpack.c.l.b16 %v654
    %v805 = vunpack.c.h.b16 %v654
    %v806 = vunpack.c.l.b16 %v655
    %v807 = vunpack.c.h.b16 %v655
    %v808 = vunpack.c.l.b16 %v656
    %v809 = vunpack.c.h.b16 %v656
    %v810 = vunpack.c.l.b16 %v657
    %v811 = vunpack.c.h.b16 %v657
    %v812 = vunpack.c.l.b16 %v658
    %v813 = vunpack.c.h.b16 %v658
    %v814 = vunpack.c.l.b16 %v659
    %v815 = vunpack.c.h.b16 %v659
    %v816 = vunpack.c.l.b16 %v660
    %v817 = vunpack.c.h.b16 %v660
    %v818 = vunpack.c.l.b16 %v661
    %v819 = vunpack.c.h.b16 %v661
    %v820 = vunpack.c.l.b16 %v662
    %v821 = vunpack.c.h.b16 %v662
    %v822 = vunpack.c.l.b16 %v663
    %v823 = vunpack.c.h.b16 %v663
    %v824 = vunpack.c.l.b16 %v664
    %v825 = vunpack.c.h.b16 %v664
    %v826 = vunpack.c.l.b16 %v665
    %v827 = vunpack.c.h.b16 %v665
    %v828 = vunpack.c.l.b16 %v666
    %v829 = vunpack.c.h.b16 %v666
    %v830 = vunpack.c.l.b16 %v667
    %v831 = vunpack.c.h.b16 %v667
    %v832 = vunpack.c.l.b16 %v668
    %v833 = vunpack.c.h.b16 %v668
    %v834 = vunpack.c.l.b16 %v669
    %v835 = vunpack.c.h.b16 %v669
    %v836 = vunpack.c.l.b16 %v670
    %v837 = vunpack.c.h.b16 %v670
    %v838 = vunpack.c.l.b16 %v671
    %v839 = vunpack.c.h.b16 %v671
    %v840 = vunpack.c.l.b16 %v672
    %v841 = vunpack.c.h.b16 %v672
    %v842 = vunpack.c.l.b16 %v673
    %v843 = vunpack.c.h.b16 %v673
    %v844 = vunpack.c.l.b16 %v674
    %v845 = vunpack.c.h.b16 %v674
    %v846 = vunpack.c.l.b16 %v675
    %v847 = vunpack.c.h.b16 %v675
    %v848 = vunpack.c.l.b16 %v676
    %v849 = vunpack.c.h.b16 %v676
    %v850 = vunpack.c.l.b16 %v677
    %v851 = vunpack.c.h.b16 %v677
    %v852 = vunpack.c.l.b16 %v678
    %v853 = vunpack.c.h.b16 %v678
    %v854 = vunpack.c.l.b16 %v679
    %v855 = vunpack.c.h.b16 %v679
    %v856 = vunpack.c.l.b16 %v680
    %v857 = vunpack.c.h.b16 %v680
    %v858 = vunpack.c.l.b16 %v681
    %v859 = vunpack.c.h.b16 %v681
    %v860 = vunpack.c.l.b16 %v682
    %v861 = vunpack.c.h.b16 %v682
    %v862 = vunpack.c.l.b16 %v683
    %v863 = vunpack.c.h.b16 %v683
    %v864 = vunpack.c.l.b16 %v684
    %v865 = vunpack.c.h.b16 %v684
    %v866 = vunpack.c.l.b16 %v685
    %v867 = vunpack.c.h.b16 %v685
    %v868 = vunpack.c.l.b16 %v686
    %v869 = vunpack.c.h.b16 %v686
    %v870 = vunpack.c.l.b16 %v687
    %v871 = vunpack.c.h.b16 %v687
    %v872 = vunpack.c.l.b16 %v688
    %v873 = vunpack.c.h.b16 %v688
    %v874 = vunpack.c.l.b16 %v689
    %v875 = vunpack.c.h.b16 %v689
    %v876 = vunpack.c.l.b16 %v690
    %v877 = vunpack.c.h.b16 %v690
    %v878 = vunpack.c.l.b16 %v691
    %v879 = vunpack.c.h.b16 %v691
    %v880 = vunpack.c.l.b16 %v692
    %v881 = vunpack.c.h.b16 %v692
    %v882 = vunpack.c.l.b16 %v693
    %v883 = vunpack.c.h.b16 %v693
    %v884 = vunpack.c.l.b16 %v694
    %v885 = vunpack.c.h.b16 %v694
    %v886 = vunpack.c.l.b16 %v695
    %v887 = vunpack.c.h.b16 %v695
    %v888 = vunpack.c.l.b16 %v696
    %v889 = vunpack.c.h.b16 %v696
    %v890 = vunpack.c.l.b16 %v697
    %v891 = vunpack.c.h.b16 %v697
    %v892 = vunpack.c.l.b16 %v698
    %v893 = vunpack.c.h.b16 %v698
    %v894 = vunpack.c.l.b16 %v699
    %v895 = vunpack.c.h.b16 %v699
    %v896 = vunpack.c.l.b16 %v700
    %v897 = vunpack.c.h.b16 %v700
    %v898 = vunpack.c.l.b16 %v701
    %v899 = vunpack.c.h.b16 %v701
    %v900 = vpack.c.b16 %v774, %v772
    %v901 = vpack.c.b16 %v775, %v773
    %v902 = vpack.c.b16 %v778, %v776
    %v903 = vpack.c.b16 %v779, %v777
    %v904 = vpack.c.b16 %v782, %v780
    %v905 = vpack.c.b16 %v783, %v781
    %v906 = vpack.c.b16 %v786, %v784
    %v907 = vpack.c.b16 %v787, %v785
    %v908 = vpack.c.b16 %v790, %v788
    %v909 = vpack.c.b16 %v791, %v789
    %v910 = vpack.c.b16 %v794, %v792
    %v911 = vpack.c.b16 %v795, %v793
    %v912 = vpack.c.b16 %v798, %v796
    %v913 = vpack.c.b16 %v799, %v797
    %v914 = vpack.c.b16 %v802, %v800
    %v915 = vpack.c.b16 %v803, %v801
    %v916 = vpack.c.b16 %v806, %v804
    %v917 = vpack.c.b16 %v807, %v805
    %v918 = vpack.c.b16 %v810, %v808
    %v919 = vpack.c.b16 %v811, %v809
    %v920 = vpack.c.b16 %v814, %v812
    %v921 = vpack.c.b16 %v815, %v813
    %v922 = vpack.c.b16 %v818, %v816
    %v923 = vpack.c.b16 %v819, %v817
    %v924 = vpack.c.b16 %v822, %v820
    %v925 = vpack.c.b16 %v823, %v821
    %v926 = vpack.c.b16 %v826, %v824
    %v927 = vpack.c.b16 %v827, %v825
    %v928 = vpack.c.b16 %v830, %v828
    %v929 = vpack.c.b16 %v831, %v829
    %v930 = vpack.c.b16 %v834, %v832
    %v931 = vpack.c.b16 %v835, %v833
    %v932 = vpack.c.b16 %v838, %v836
    %v933 = vpack.c.b16 %v839, %v837
    %v934 = vpack.c.b16 %v842, %v840
    %v935 = vpack.c.b16 %v843, %v841
    %v936 = vpack.c.b16 %v846, %v844
    %v937 = vpack.c.b16 %v847, %v845
    %v938 = vpack.c.b16 %v850, %v848
    %v939 = vpack.c.b16 %v851, %v849
    %v940 = vpack.c.b16 %v854, %v852
    %v941 = vpack.c.b16 %v855, %v853
    %v942 = vpack.c.b16 %v858, %v856
    %v943 = vpack.c.b16 %v859, %v857
    %v944 = vpack.c.b16 %v862, %v860
    %v945 = vpack.c.b16 %v863, %v861
    %v946 = vpack.c.b16 %v866, %v864
    %v947 = vpack.c.b16 %v867, %v865
    %v948 = vpack.c.b16 %v870, %v868
    %v949 = vpack.c.b16 %v871, %v869
    %v950 = vpack.c.b16 %v874, %v872
    %v951 = vpack.c.b16 %v875, %v873
    %v952 = vpack.c.b16 %v878, %v876
    %v953 = vpack.c.b16 %v879, %v877
    %v954 = vpack.c.b16 %v882, %v880
    %v955 = vpack.c.b16 %v883, %v881
    %v956 = vpack.c.b16 %v886, %v884
    %v957 = vpack.c.b16 %v887, %v885
    %v958 = vpack.c.b16 %v890, %v888
    %v959 = vpack.c.b16 %v891, %v889
    %v960 = vpack.c.b16 %v894, %v892
    %v961 = vpack.c.b16 %v895, %v893
    %v962 = vpack.c.b16 %v898, %v896
    %v963 = vpack.c.b16 %v899, %v897
    %1028 = vmatpush.bf16.msra.mxu0 %v914
    %1029 = vmatpush.bf16.msra.mxu0 %v912
    %1030 = vmatpush.bf16.msra.mxu0 %v910
    %1031 = vmatpush.bf16.msra.mxu0 %v908
    %1032 = vmatpush.bf16.msra.mxu0 %v906
    %1033 = vmatpush.bf16.msra.mxu0 %v904
    %1034 = vmatpush.bf16.msra.mxu0 %v902
    %1035 = vmatpush.bf16.msra.mxu0 %v900
    %1036 = vmatmul.bf16.gmra.mxu0 %v626
    %v1037 = vpop.f32.mrf.mxu0
    %v1038 = vadd.f32 %v704, %v1037
    %v1039 = vpop.f32.mrf.mxu0
    %v1040 = vadd.f32 %v704, %v1039
    %1041 = vmatmul.bf16.gmra.mxu0 %v630
    %v1042 = vpop.f32.mrf.mxu0
    %v1043 = vadd.f32 %v704, %v1042
    %v1044 = vpop.f32.mrf.mxu0
    %v1045 = vadd.f32 %v704, %v1044
    %1046 = vmatmul.bf16.gmra.mxu0 %v634
    %v1047 = vpop.f32.mrf.mxu0
    %v1048 = vadd.f32 %v704, %v1047
    %v1049 = vpop.f32.mrf.mxu0
    %v1050 = vadd.f32 %v704, %v1049
    %1051 = vdwg.mxu0
    %1052 = vmatpush.bf16.msra.mxu0 %v930
    %1053 = vmatpush.bf16.msra.mxu0 %v928
    %1054 = vmatpush.bf16.msra.mxu0 %v926
    %1055 = vmatpush.bf16.msra.mxu0 %v924
    %1056 = vmatpush.bf16.msra.mxu0 %v922
    %1057 = vmatpush.bf16.msra.mxu0 %v920
    %1058 = vmatpush.bf16.msra.mxu0 %v918
    %1059 = vmatpush.bf16.msra.mxu0 %v916
    %1060 = vmatmul.bf16.gmra.mxu0 %v627
    %v1061 = vpop.f32.mrf.mxu0
    %v1062 = vadd.f32 %v1038, %v1061
    %v1063 = vpop.f32.mrf.mxu0
    %v1064 = vadd.f32 %v1040, %v1063
    %1065 = vmatmul.bf16.gmra.mxu0 %v631
    %v1066 = vpop.f32.mrf.mxu0
    %v1067 = vadd.f32 %v1043, %v1066
    %v1068 = vpop.f32.mrf.mxu0
    %v1069 = vadd.f32 %v1045, %v1068
    %1070 = vmatmul.bf16.gmra.mxu0 %v635
    %v1071 = vpop.f32.mrf.mxu0
    %v1072 = vadd.f32 %v1048, %v1071
    %v1073 = vpop.f32.mrf.mxu0
    %v1074 = vadd.f32 %v1050, %v1073
    %1075 = vdwg.mxu0
    %1076 = vmatpush.bf16.msra.mxu0 %v946
    %1077 = vmatpush.bf16.msra.mxu0 %v944
    %1078 = vmatpush.bf16.msra.mxu0 %v942
    %1079 = vmatpush.bf16.msra.mxu0 %v940
    %1080 = vmatpush.bf16.msra.mxu0 %v938
    %1081 = vmatpush.bf16.msra.mxu0 %v936
    %1082 = vmatpush.bf16.msra.mxu0 %v934
    %1083 = vmatpush.bf16.msra.mxu0 %v932
    %1084 = vmatmul.bf16.gmra.mxu0 %v628
    %v1085 = vpop.f32.mrf.mxu0
    %v1086 = vadd.f32 %v1062, %v1085
    %v1087 = vpop.f32.mrf.mxu0
    %v1088 = vadd.f32 %v1064, %v1087
    %1089 = vmatmul.bf16.gmra.mxu0 %v632
    %v1090 = vpop.f32.mrf.mxu0
    %v1091 = vadd.f32 %v1067, %v1090
    %v1092 = vpop.f32.mrf.mxu0
    %v1093 = vadd.f32 %v1069, %v1092
    %1094 = vmatmul.bf16.gmra.mxu0 %v636
    %v1095 = vpop.f32.mrf.mxu0
    %v1096 = vadd.f32 %v1072, %v1095
    %v1097 = vpop.f32.mrf.mxu0
    %v1098 = vadd.f32 %v1074, %v1097
    %1099 = vdwg.mxu0
    %1100 = vmatpush.bf16.msra.mxu0 %v962
    %1101 = vmatpush.bf16.msra.mxu0 %v960
    %1102 = vmatpush.bf16.msra.mxu0 %v958
    %1103 = vmatpush.bf16.msra.mxu0 %v956
    %1104 = vmatpush.bf16.msra.mxu0 %v954
    %1105 = vmatpush.bf16.msra.mxu0 %v952
    %1106 = vmatpush.bf16.msra.mxu0 %v950
    %1107 = vmatpush.bf16.msra.mxu0 %v948
    %1108 = vmatmul.bf16.gmra.mxu0 %v629
    %v1109 = vpop.f32.mrf.mxu0
    %v1110 = vadd.f32 %v1086, %v1109
    %v1111 = vpop.f32.mrf.mxu0
    %v1112 = vadd.f32 %v1088, %v1111
    %1113 = vmatmul.bf16.gmra.mxu0 %v633
    %v1114 = vpop.f32.mrf.mxu0
    %v1115 = vadd.f32 %v1091, %v1114
    %v1116 = vpop.f32.mrf.mxu0
    %v1117 = vadd.f32 %v1093, %v1116
    %1118 = vmatmul.bf16.gmra.mxu0 %v637
    %v1119 = vpop.f32.mrf.mxu0
    %v1120 = vadd.f32 %v1096, %v1119
    %v1121 = vpop.f32.mrf.mxu0
    %v1122 = vadd.f32 %v1098, %v1121
    %1123 = vdwg.mxu0
    %1124 = vmatpush.bf16.msra.mxu0 %v915
    %1125 = vmatpush.bf16.msra.mxu0 %v913
    %1126 = vmatpush.bf16.msra.mxu0 %v911
    %1127 = vmatpush.bf16.msra.mxu0 %v909
    %1128 = vmatpush.bf16.msra.mxu0 %v907
    %1129 = vmatpush.bf16.msra.mxu0 %v905
    %1130 = vmatpush.bf16.msra.mxu0 %v903
    %1131 = vmatpush.bf16.msra.mxu0 %v901
    %1132 = vmatmul.bf16.gmra.mxu0 %v626
    %v1133 = vpop.f32.mrf.mxu0
    %v1134 = vadd.f32 %v705, %v1133
    %v1135 = vpop.f32.mrf.mxu0
    %v1136 = vadd.f32 %v705, %v1135
    %1137 = vmatmul.bf16.gmra.mxu0 %v630
    %v1138 = vpop.f32.mrf.mxu0
    %v1139 = vadd.f32 %v705, %v1138
    %v1140 = vpop.f32.mrf.mxu0
    %v1141 = vadd.f32 %v705, %v1140
    %1142 = vmatmul.bf16.gmra.mxu0 %v634
    %v1143 = vpop.f32.mrf.mxu0
    %v1144 = vadd.f32 %v705, %v1143
    %v1145 = vpop.f32.mrf.mxu0
    %v1146 = vadd.f32 %v705, %v1145
    %1147 = vdwg.mxu0
    %1148 = vmatpush.bf16.msra.mxu0 %v931
    %1149 = vmatpush.bf16.msra.mxu0 %v929
    %1150 = vmatpush.bf16.msra.mxu0 %v927
    %1151 = vmatpush.bf16.msra.mxu0 %v925
    %1152 = vmatpush.bf16.msra.mxu0 %v923
    %1153 = vmatpush.bf16.msra.mxu0 %v921
    %1154 = vmatpush.bf16.msra.mxu0 %v919
    %1155 = vmatpush.bf16.msra.mxu0 %v917
    %1156 = vmatmul.bf16.gmra.mxu0 %v627
    %v1157 = vpop.f32.mrf.mxu0
    %v1158 = vadd.f32 %v1134, %v1157
    %v1159 = vpop.f32.mrf.mxu0
    %v1160 = vadd.f32 %v1136, %v1159
    %1161 = vmatmul.bf16.gmra.mxu0 %v631
    %v1162 = vpop.f32.mrf.mxu0
    %v1163 = vadd.f32 %v1139, %v1162
    %v1164 = vpop.f32.mrf.mxu0
    %v1165 = vadd.f32 %v1141, %v1164
    %1166 = vmatmul.bf16.gmra.mxu0 %v635
    %v1167 = vpop.f32.mrf.mxu0
    %v1168 = vadd.f32 %v1144, %v1167
    %v1169 = vpop.f32.mrf.mxu0
    %v1170 = vadd.f32 %v1146, %v1169
    %1171 = vdwg.mxu0
    %1172 = vmatpush.bf16.msra.mxu0 %v947
    %1173 = vmatpush.bf16.msra.mxu0 %v945
    %1174 = vmatpush.bf16.msra.mxu0 %v943
    %1175 = vmatpush.bf16.msra.mxu0 %v941
    %1176 = vmatpush.bf16.msra.mxu0 %v939
    %1177 = vmatpush.bf16.msra.mxu0 %v937
    %1178 = vmatpush.bf16.msra.mxu0 %v935
    %1179 = vmatpush.bf16.msra.mxu0 %v933
    %1180 = vmatmul.bf16.gmra.mxu0 %v628
    %v1181 = vpop.f32.mrf.mxu0
    %v1182 = vadd.f32 %v1158, %v1181
    %v1183 = vpop.f32.mrf.mxu0
    %v1184 = vadd.f32 %v1160, %v1183
    %1185 = vmatmul.bf16.gmra.mxu0 %v632
    %v1186 = vpop.f32.mrf.mxu0
    %v1187 = vadd.f32 %v1163, %v1186
    %v1188 = vpop.f32.mrf.mxu0
    %v1189 = vadd.f32 %v1165, %v1188
    %1190 = vmatmul.bf16.gmra.mxu0 %v636
    %v1191 = vpop.f32.mrf.mxu0
    %v1192 = vadd.f32 %v1168, %v1191
    %v1193 = vpop.f32.mrf.mxu0
    %v1194 = vadd.f32 %v1170, %v1193
    %1195 = vdwg.mxu0
    %1196 = vmatpush.bf16.msra.mxu0 %v963
    %1197 = vmatpush.bf16.msra.mxu0 %v961
    %1198 = vmatpush.bf16.msra.mxu0 %v959
    %1199 = vmatpush.bf16.msra.mxu0 %v957
    %1200 = vmatpush.bf16.msra.mxu0 %v955
    %1201 = vmatpush.bf16.msra.mxu0 %v953
    %1202 = vmatpush.bf16.msra.mxu0 %v951
    %1203 = vmatpush.bf16.msra.mxu0 %v949
    %1204 = vmatmul.bf16.gmra.mxu0 %v629
    %v1205 = vpop.f32.mrf.mxu0
    %v1206 = vadd.f32 %v1182, %v1205
    %v1207 = vpop.f32.mrf.mxu0
    %v1208 = vadd.f32 %v1184, %v1207
    %1209 = vmatmul.bf16.gmra.mxu0 %v633
    %v1210 = vpop.f32.mrf.mxu0
    %v1211 = vadd.f32 %v1187, %v1210
    %v1212 = vpop.f32.mrf.mxu0
    %v1213 = vadd.f32 %v1189, %v1212
    %1214 = vmatmul.bf16.gmra.mxu0 %v637
    %v1215 = vpop.f32.mrf.mxu0
    %v1216 = vadd.f32 %v1192, %v1215
    %v1217 = vpop.f32.mrf.mxu0
    %v1218 = vadd.f32 %v1194, %v1217
    %1219 = vdwg.mxu0
    %v1220 = vmax.f32 %v1110, 0.0
    %v1221 = vmax.f32 %v1206, 0.0
    %v1222 = vmax.f32 %v1112, 0.0
    %v1223 = vmax.f32 %v1208, 0.0
    %v1224 = vmax.f32 %v1115, 0.0
    %v1225 = vmax.f32 %v1211, 0.0
    %v1226 = vmax.f32 %v1117, 0.0
    %v1227 = vmax.f32 %v1213, 0.0
    %v1228 = vmax.f32 %v1120, 0.0
    %v1229 = vmax.f32 %v1216, 0.0
    %v1230 = vmax.f32 %v1122, 0.0
    %v1231 = vmax.f32 %v1218, 0.0
    %v1232 = vpack.c.bf16 %v1222, %v1220
    %v1233 = vpack.c.bf16 %v1223, %v1221
    %v1234 = vpack.c.bf16 %v1226, %v1224
    %v1235 = vpack.c.bf16 %v1227, %v1225
    %v1236 = vpack.c.bf16 %v1230, %v1228
    %v1237 = vpack.c.bf16 %v1231, %v1229
    %v1238 = vld [vmem:[%s5] sm:$0xf]
    %v1239 = vld [vmem:[%s5 + $0x4] sm:$0xf]
    %v1240 = vld [vmem:[%s5 + $0x8] sm:$0xf]
    %v1241 = vld [vmem:[%s5 + $0xc] sm:$0xf]
    %v1242 = vld [vmem:[%s5 + $0x10] sm:$0xf]
    %v1243 = vld [vmem:[%s5 + $0x14] sm:$0xf]
    %v1244 = vld [vmem:[%s5 + $0x18] sm:$0xf]
    %v1245 = vld [vmem:[%s5 + $0x1c] sm:$0xf]
    %v1246 = vld [vmem:[%s5 + $0x20] sm:$0xf]
    %v1247 = vld [vmem:[%s5 + $0x24] sm:$0xf]
    %v1248 = vld [vmem:[%s5 + $0x28] sm:$0xf]
    %v1249 = vld [vmem:[%s5 + $0x2c] sm:$0xf]
    %v1250 = vld [vmem:[%s5 + $0x30] sm:$0xf]
    %v1251 = vld [vmem:[%s5 + $0x34] sm:$0xf]
    %v1252 = vld [vmem:[%s5 + $0x38] sm:$0xf]
    %v1253 = vld [vmem:[%s5 + $0x3c] sm:$0xf]
    %v1254 = vld [vmem:[%s5 + $0x40] sm:$0xf]
    %v1255 = vld [vmem:[%s5 + $0x44] sm:$0xf]
    %v1256 = vld [vmem:[%s5 + $0x48] sm:$0xf]
    %v1257 = vld [vmem:[%s5 + $0x4c] sm:$0xf]
    %v1258 = vld [vmem:[%s5 + $0x50] sm:$0xf]
    %v1259 = vld [vmem:[%s5 + $0x54] sm:$0xf]
    %v1260 = vld [vmem:[%s5 + $0x58] sm:$0xf]
    %v1261 = vld [vmem:[%s5 + $0x5c] sm:$0xf]
    %v1262 = vld [vmem:[%s5 + $0x60] sm:$0xf]
    %v1263 = vld [vmem:[%s5 + $0x64] sm:$0xf]
    %v1264 = vld [vmem:[%s5 + $0x68] sm:$0xf]
    %v1265 = vld [vmem:[%s5 + $0x6c] sm:$0xf]
    %v1266 = vld [vmem:[%s5 + $0x70] sm:$0xf]
    %v1267 = vld [vmem:[%s5 + $0x74] sm:$0xf]
    %v1268 = vld [vmem:[%s5 + $0x78] sm:$0xf]
    %v1269 = vld [vmem:[%s5 + $0x7c] sm:$0xf]
    %v1270 = vld [vmem:[%s6] sm:$0x1]
    %v1272 = vperm.slane %v1270, 0
    %v1306 = vunpack.c.l.b16 %v1238
    %v1307 = vunpack.c.l.b16 %v1239
    %v1308 = vunpack.c.l.b16 %v1240
    %v1309 = vunpack.c.l.b16 %v1241
    %v1310 = vunpack.c.l.b16 %v1242
    %v1311 = vunpack.c.l.b16 %v1243
    %v1312 = vunpack.c.l.b16 %v1244
    %v1313 = vunpack.c.l.b16 %v1245
    %v1314 = vunpack.c.l.b16 %v1246
    %v1315 = vunpack.c.l.b16 %v1247
    %v1316 = vunpack.c.l.b16 %v1248
    %v1317 = vunpack.c.l.b16 %v1249
    %v1318 = vunpack.c.l.b16 %v1250
    %v1319 = vunpack.c.l.b16 %v1251
    %v1320 = vunpack.c.l.b16 %v1252
    %v1321 = vunpack.c.l.b16 %v1253
    %v1322 = vunpack.c.l.b16 %v1254
    %v1323 = vunpack.c.l.b16 %v1255
    %v1324 = vunpack.c.l.b16 %v1256
    %v1325 = vunpack.c.l.b16 %v1257
    %v1326 = vunpack.c.l.b16 %v1258
    %v1327 = vunpack.c.l.b16 %v1259
    %v1328 = vunpack.c.l.b16 %v1260
    %v1329 = vunpack.c.l.b16 %v1261
    %v1330 = vunpack.c.l.b16 %v1262
    %v1331 = vunpack.c.l.b16 %v1263
    %v1332 = vunpack.c.l.b16 %v1264
    %v1333 = vunpack.c.l.b16 %v1265
    %v1334 = vunpack.c.l.b16 %v1266
    %v1335 = vunpack.c.l.b16 %v1267
    %v1336 = vunpack.c.l.b16 %v1268
    %v1337 = vunpack.c.l.b16 %v1269
    %v1338 = vpack.c.b16 %v1307, %v1306
    %v1339 = vpack.c.b16 %v1309, %v1308
    %v1340 = vpack.c.b16 %v1311, %v1310
    %v1341 = vpack.c.b16 %v1313, %v1312
    %v1342 = vpack.c.b16 %v1315, %v1314
    %v1343 = vpack.c.b16 %v1317, %v1316
    %v1344 = vpack.c.b16 %v1319, %v1318
    %v1345 = vpack.c.b16 %v1321, %v1320
    %v1346 = vpack.c.b16 %v1323, %v1322
    %v1347 = vpack.c.b16 %v1325, %v1324
    %v1348 = vpack.c.b16 %v1327, %v1326
    %v1349 = vpack.c.b16 %v1329, %v1328
    %v1350 = vpack.c.b16 %v1331, %v1330
    %v1351 = vpack.c.b16 %v1333, %v1332
    %v1352 = vpack.c.b16 %v1335, %v1334
    %v1353 = vpack.c.b16 %v1337, %v1336
    %1370 = vmatpush.bf16.msra.mxu0 %v1345
    %1371 = vmatpush.bf16.msra.mxu0 %v1344
    %1372 = vmatpush.bf16.msra.mxu0 %v1343
    %1373 = vmatpush.bf16.msra.mxu0 %v1342
    %1374 = vmatpush.bf16.msra.mxu0 %v1341
    %1375 = vmatpush.bf16.msra.mxu0 %v1340
    %1376 = vmatpush.bf16.msra.mxu0 %v1339
    %1377 = vmatpush.bf16.msra.mxu0 %v1338
    %1378 = vmatmul.bf16.gmra.mxu0 %v1232
    %v1379 = vpop.f32.mrf.mxu0
    %v1380 = vadd.f32 %v1272, %v1379
    %v1381 = vpop.f32.mrf.mxu0
    %v1382 = vadd.f32 %v1272, %v1381
    %1383 = vmatmul.bf16.gmra.mxu0 %v1234
    %v1384 = vpop.f32.mrf.mxu0
    %v1385 = vadd.f32 %v1272, %v1384
    %v1386 = vpop.f32.mrf.mxu0
    %v1387 = vadd.f32 %v1272, %v1386
    %1388 = vmatmul.bf16.gmra.mxu0 %v1236
    %v1389 = vpop.f32.mrf.mxu0
    %v1390 = vadd.f32 %v1272, %v1389
    %v1391 = vpop.f32.mrf.mxu0
    %v1392 = vadd.f32 %v1272, %v1391
    %1393 = vdwg.mxu0
    %1394 = vmatpush.bf16.msra.mxu0 %v1353
    %1395 = vmatpush.bf16.msra.mxu0 %v1352
    %1396 = vmatpush.bf16.msra.mxu0 %v1351
    %1397 = vmatpush.bf16.msra.mxu0 %v1350
    %1398 = vmatpush.bf16.msra.mxu0 %v1349
    %1399 = vmatpush.bf16.msra.mxu0 %v1348
    %1400 = vmatpush.bf16.msra.mxu0 %v1347
    %1401 = vmatpush.bf16.msra.mxu0 %v1346
    %1402 = vmatmul.bf16.gmra.mxu0 %v1233
    %v1403 = vpop.f32.mrf.mxu0
    %v1404 = vadd.f32 %v1380, %v1403
    %v1405 = vpop.f32.mrf.mxu0
    %v1406 = vadd.f32 %v1382, %v1405
    %1407 = vmatmul.bf16.gmra.mxu0 %v1235
    %v1408 = vpop.f32.mrf.mxu0
    %v1409 = vadd.f32 %v1385, %v1408
    %v1410 = vpop.f32.mrf.mxu0
    %v1411 = vadd.f32 %v1387, %v1410
    %1412 = vmatmul.bf16.gmra.mxu0 %v1237
    %v1413 = vpop.f32.mrf.mxu0
    %v1414 = vadd.f32 %v1390, %v1413
    %v1415 = vpop.f32.mrf.mxu0
    %v1416 = vadd.f32 %v1392, %v1415
    %1417 = vdwg.mxu0
    %1418 = vst [vmem:[#allocation6] sm:$0xff] %v1404
    %1419 = vst [vmem:[#allocation6 + $0x8] sm:$0xff] %v1406
    %1420 = vst [vmem:[#allocation6 + $0x10] sm:$0xff] %v1409
    %1421 = vst [vmem:[#allocation6 + $0x18] sm:$0xff] %v1411
    %1422 = vst [vmem:[#allocation6 + $0x20] sm:$0xff] %v1414
    %1423 = vst [vmem:[#allocation6 + $0x28] sm:$0xff] %v1416
    // Predicated region
    $region38: #{encoder_forward.1} parent=1 // pred_check
      _
    $region39: #{encoder_forward.1} parent=1 // pred_check_branch
      %1425 = sbr.rel (0) target = $region41
    $region40: #{encoder_forward.1} parent=1 // pred_region
      // Predicated region
      $region42: #{encoder_forward.1} parent=40 // pred_check
        _
      $region43: #{encoder_forward.1} parent=40 // pred_check_branch
        %1427 = sbr.rel (0) target = $region45
      $region44: #{encoder_forward.1} parent=40 // pred_region
        // Predicated region
        $region46: #{encoder_forward.1} parent=44 // pred_check
          _
        $region47: #{encoder_forward.1} parent=44 // pred_check_branch
          %1429 = sbr.rel (0) target = $region49
        $region48: #{encoder_forward.1} parent=44 // pred_region
          // Predicated region
          $region61: #{encoder_forward.1} parent=48 // pred_check
            _
          $region62: #{encoder_forward.1} parent=48 // pred_check_branch
            %1453 = sbr.rel (0) target = $region64
          $region63: #{encoder_forward.1} parent=48 // pred_region
            loop: start=0, step=1, limit=1
            $region65: #{encoder_forward.1} parent=63 // loop_pre_header
              _
            $region66: #{encoder_forward.1} parent=63 // loop_header
              %s1455 = sphi 0, %s1459
              %p1456 = scmp.ge.s32.totalorder %s1455, 1
              %s1460 = sphi [#allocation6], [#allocation6]
              %s1461 = sphi %s7, %s7
            $region67: #{encoder_forward.1} parent=63 // loop_header_branch
              %1458 = sbr.rel (%p1456) target = $region71
            $region68: #{encoder_forward.1} parent=63 // loop_body
              %v1462 = vld [vmem:[%s1460] sm:$0xff]
              %1463 = vst [vmem:[%s1461] sm:$0xff] %v1462
              %v1464 = vld [vmem:[%s1460 + $0x8] sm:$0xff]
              %1465 = vst [vmem:[%s1461 + $0x8] sm:$0xff] %v1464
              %v1466 = vld [vmem:[%s1460 + $0x10] sm:$0xff]
              %1467 = vst [vmem:[%s1461 + $0x10] sm:$0xff] %v1466
              %v1468 = vld [vmem:[%s1460 + $0x18] sm:$0xff]
              %1469 = vst [vmem:[%s1461 + $0x18] sm:$0xff] %v1468
              %v1470 = vld [vmem:[%s1460 + $0x20] sm:$0xff]
              %1471 = vst [vmem:[%s1461 + $0x20] sm:$0xff] %v1470
            $region69: #{encoder_forward.1} parent=63 // loop_footer
              %s1459 = sadd.s32 1, %s1455
            $region70: #{encoder_forward.1} parent=63 // loop_footer_branch
              %1454 = sbr.rel target = $region66
            $region71: #{encoder_forward.1} parent=63 // loop_exit
              _
          $region64: #{encoder_forward.1} parent=48 // pred_fallthru
            _
          // Predicated region
          $region72: #{encoder_forward.1} parent=48 // pred_check
            _
          $region73: #{encoder_forward.1} parent=48 // pred_check_branch
            %1473 = sbr.rel target = $region75
          $region74: #{encoder_forward.1} parent=48 // pred_region
            _
          $region75: #{encoder_forward.1} parent=48 // pred_fallthru
            _
        $region49: #{encoder_forward.1} parent=44 // pred_fallthru
          _
        // Predicated region
        $region50: #{encoder_forward.1} parent=44 // pred_check
          _
        $region51: #{encoder_forward.1} parent=44 // pred_check_branch
          %1431 = sbr.rel target = $region53
        $region52: #{encoder_forward.1} parent=44 // pred_region
          %s1433 = ssub.s32 256, 1
          loop: start=0, step=1, limit=1
          $region54: #{encoder_forward.1} parent=52 // loop_pre_header
            _
          $region55: #{encoder_forward.1} parent=52 // loop_header
            %s1435 = sphi 0, %s1439
            %p1436 = scmp.ge.s32.totalorder %s1435, 1
            %s1440 = sphi [#allocation6], [#allocation6]
            %s1441 = sphi %s7, %s7
          $region56: #{encoder_forward.1} parent=52 // loop_header_branch
            %1438 = sbr.rel (%p1436) target = $region60
          $region57: #{encoder_forward.1} parent=52 // loop_body
            %v1442 = vld [vmem:[%s1440] sm:%s1433]
            %1443 = vst [vmem:[%s1441] sm:%s1433] %v1442
            %v1444 = vld [vmem:[%s1440 + $0x8] sm:%s1433]
            %1445 = vst [vmem:[%s1441 + $0x8] sm:%s1433] %v1444
            %v1446 = vld [vmem:[%s1440 + $0x10] sm:%s1433]
            %1447 = vst [vmem:[%s1441 + $0x10] sm:%s1433] %v1446
            %v1448 = vld [vmem:[%s1440 + $0x18] sm:%s1433]
            %1449 = vst [vmem:[%s1441 + $0x18] sm:%s1433] %v1448
            %v1450 = vld [vmem:[%s1440 + $0x20] sm:%s1433]
            %1451 = vst [vmem:[%s1441 + $0x20] sm:%s1433] %v1450
          $region58: #{encoder_forward.1} parent=52 // loop_footer
            %s1439 = sadd.s32 1, %s1435
          $region59: #{encoder_forward.1} parent=52 // loop_footer_branch
            %1434 = sbr.rel target = $region55
          $region60: #{encoder_forward.1} parent=52 // loop_exit
            _
        $region53: #{encoder_forward.1} parent=44 // pred_fallthru
          _
      $region45: #{encoder_forward.1} parent=40 // pred_fallthru
        _
      %1474 = vnop
    $region41: #{encoder_forward.1} parent=1 // pred_fallthru
      _
    // Predicated region
    $region76: #{encoder_forward.1} parent=1 // pred_check
      _
    $region77: #{encoder_forward.1} parent=1 // pred_check_branch
      %1476 = sbr.rel (0) target = $region79
    $region78: #{encoder_forward.1} parent=1 // pred_region
      _
    $region79: #{encoder_forward.1} parent=1 // pred_fallthru
      _
    %1477 = vsyncpa [#allocation3], 1
    %1478 = vsyncpa [#allocation5], 1

</llo_original>
